<compile_context>
chip_gen: v7x
topology: tpu7x:2x2x1
jax: 0.10.0
libtpu: 0.0.40
codegen_flags: <defaults>
</compile_context>

<pallas_src>
import functools

import jax
import jax.numpy as jnp
from jax.experimental import pallas as pl
from jax.experimental.pallas import tpu as pltpu

_LANE = 128
_BLOCK_BYTES = 2 * 1024 * 1024   # HBM bytes per input per grid step (~2 MiB)
_CHUNK = 512                     # rows per inner accumulation chunk (256 KiB f32)


def _round_up(x, m):
    return (x + m - 1) // m * m


def _detect_ncores():
    # Split the leading "parallel" grid axis across TensorCores only on
    # multi-TC chips (v7x); on single-TC v5e/v6e it would just be a serial
    # 2x loop with a duplicated tail-block DMA.
    try:
        kind = jax.devices()[0].device_kind.lower()
    except Exception:
        return 1
    return 2 if ("v7" in kind or "tpu7" in kind) else 1


def _accum_chunk(p_ref, l_ref, sq_acc, abs_acc, lsq_acc, start, nrows,
                 valid_rows=None):
    """Accumulate `nrows` rows (static, multiple of 8) starting at `start`."""
    p = p_ref[pl.ds(start, nrows), :].astype(jnp.float32)
    l = l_ref[pl.ds(start, nrows), :].astype(jnp.float32)
    if valid_rows is not None:
        # Cold path: only the single partially-valid chunk of the ragged block.
        ids = jax.lax.broadcasted_iota(jnp.int32, (nrows, 1), 0)
        keep = ids < valid_rows
        p = jnp.where(keep, p, 0.0)
        l = jnp.where(keep, l, 0.0)
    d = p - l
    # vreg-aligned elementwise accumulation into (8,128) scratch (pure VPU adds)
    sq_acc[...] += jnp.sum((d * d).reshape(-1, 8, _LANE), axis=0)
    abs_acc[...] += jnp.sum(jnp.abs(d).reshape(-1, 8, _LANE), axis=0)
    if lsq_acc is not None:
        lsq_acc[...] += jnp.sum((l * l).reshape(-1, 8, _LANE), axis=0)


def _mse_sums_kernel(p_ref, l_ref, out_ref, *scratch,
                     tm, chunk, rows, ncores, normalize):
    if normalize:
        sq_acc, abs_acc, lsq_acc = scratch
    else:
        sq_acc, abs_acc = scratch
        lsq_acc = None

    c = pl.program_id(0)
    j = pl.program_id(1)

    @pl.when(j == 0)
    def _():
        sq_acc[...] = jnp.zeros_like(sq_acc)
        abs_acc[...] = jnp.zeros_like(abs_acc)
        if normalize:
            lsq_acc[...] = jnp.zeros_like(lsq_acc)

    def chunk_at(start, nrows, valid_rows=None):
        _accum_chunk(p_ref, l_ref, sq_acc, abs_acc, lsq_acc,
                     start, nrows, valid_rows)

    def accum_full_block():            # hot path: no selects, no masks
        n_full = tm // chunk
        rem = tm % chunk
        if n_full > 0:
            def body(i, carry):
                chunk_at(pl.multiple_of(i * chunk, chunk), chunk)
                return carry
            jax.lax.fori_loop(0, n_full, body, 0, unroll=True)
        if rem:
            chunk_at(n_full * chunk, rem)

    def accum_ragged_block():          # cold path: globally-last ragged block
        valid = rows % tm              # static, in [1, tm)
        vfull = valid // chunk
        vrem = valid % chunk
        if vfull > 0:
            def body(i, carry):
                chunk_at(pl.multiple_of(i * chunk, chunk), chunk)
                return carry
            jax.lax.fori_loop(0, vfull, body, 0, unroll=True)
        if vrem:
            load = min(chunk, tm - vfull * chunk)   # static, multiple of 8
            chunk_at(vfull * chunk, load, valid_rows=vrem)

    n_full_blocks = rows // tm
    ragged = rows % tm
    block = j * ncores + c             # interleaved global block index

    if ncores == 1 and ragged == 0:
        accum_full_block()             # branch- and select-free common case
    elif ncores == 1 and n_full_blocks == 0:
        accum_ragged_block()           # single (ragged) block
    else:
        if n_full_blocks > 0:
            @pl.when(block < n_full_blocks)
            def _():
                accum_full_block()
        if ragged:
            @pl.when(block == n_full_blocks)
            def _():
                accum_ragged_block()
        # blocks beyond the last (clamped duplicates) skip all compute

    @pl.when(j == pl.num_programs(1) - 1)
    def _():
        out_ref[0, 0] = jnp.sum(sq_acc[...])
        out_ref[0, 1] = jnp.sum(abs_acc[...])
        if normalize:
            out_ref[0, 2] = jnp.sum(lsq_acc[...])


def _reduce_sums(pm, lm, normalize):
    """pm/lm: (rows, 128) native-dtype views. Returns (n_out,) f32 sums."""
    rows = pm.shape[0]
    itemsize = jnp.dtype(pm.dtype).itemsize
    tm = max(8, _BLOCK_BYTES // (_LANE * itemsize))   # 4096 f32 / 8192 bf16
    tm = min(tm, _round_up(rows, 8))
    chunk = min(_CHUNK, tm)

    total_blocks = pl.cdiv(rows, tm)
    ncores = min(_detect_ncores(), total_blocks)      # no duplicate re-read of
    steps = pl.cdiv(total_blocks, ncores)             # small inputs
    has_dup = ncores * steps != total_blocks

    n_out = 3 if normalize else 2

    kernel = functools.partial(_mse_sums_kernel, tm=tm, chunk=chunk, rows=rows,
                               ncores=ncores, normalize=normalize)

    def in_map(c, j):
        b = j * ncores + c
        if has_dup:
            # Clamp so the DMA never leaves the array; duplicated blocks are
            # skipped entirely inside the kernel.
            b = jnp.minimum(b, total_blocks - 1)
        return (b, 0)

    out = pl.pallas_call(
        kernel,
        out_shape=jax.ShapeDtypeStruct((ncores, n_out), jnp.float32),
        grid_spec=pltpu.PrefetchScalarGridSpec(
            num_scalar_prefetch=0,
            grid=(ncores, steps),
            in_specs=[pl.BlockSpec((tm, _LANE), in_map),
                      pl.BlockSpec((tm, _LANE), in_map)],
            out_specs=pl.BlockSpec((1, n_out), lambda c, j: (c, 0),
                                   memory_space=pltpu.SMEM),
            scratch_shapes=[pltpu.VMEM((8, _LANE), jnp.float32)
                            for _ in range(n_out)],
        ),
        compiler_params=pltpu.CompilerParams(
            dimension_semantics=("parallel", "arbitrary"),
            vmem_limit_bytes=32 * 1024 * 1024,
        ),
    )(pm, lm)
    return jnp.sum(out, axis=0)        # combine per-core partial sums


@functools.partial(jax.jit, static_argnames=("normalize",))
def mse_loss(preds, labels, *, normalize=True):
    """Pallas equivalent of MseLoss.forward (reduction='mean' everywhere)."""
    n = preds.size
    if n == 0:                         # empty input: means are NaN (as torch)
        nan = jnp.float32(jnp.nan)
        out = dict(mse=nan, rmse=nan, mae=nan)
        if normalize:
            out["nmse"] = nan
        return out

    pf = preds.reshape(-1)
    lf = labels.reshape(-1)
    rows = n // _LANE
    tail = n % _LANE
    n_out = 3 if normalize else 2

    if rows > 0:
        if tail == 0:
            pm = pf.reshape(rows, _LANE)            # zero-copy reshape
            lm = lf.reshape(rows, _LANE)
        else:
            # TODO(synk): XLA may materialize this prefix slice; a fully
            # zero-copy ragged path would need 1-D blocks / manual DMA.
            pm = pf[: rows * _LANE].reshape(rows, _LANE)
            lm = lf[: rows * _LANE].reshape(rows, _LANE)
        sums = _reduce_sums(pm, lm, normalize)
    else:
        sums = jnp.zeros((n_out,), jnp.float32)

    if tail:
        # <128-element tail: tiny plain-JAX epilogue instead of padding+copying
        # the whole inputs.
        pt = pf[rows * _LANE:].astype(jnp.float32)
        lt = lf[rows * _LANE:].astype(jnp.float32)
        dt = pt - lt
        tail_sums = [jnp.sum(dt * dt), jnp.sum(jnp.abs(dt))]
        if normalize:
            tail_sums.append(jnp.sum(lt * lt))
        sums = sums + jnp.stack(tail_sums)

    cnt = jnp.float32(n)
    mse = sums[0] / cnt
    mae = sums[1] / cnt
    result = dict(mse=mse, rmse=jnp.sqrt(mse), mae=mae)
    if normalize:
        result["nmse"] = sums[0] / sums[2]          # == mse / mean(labels**2)
    return result
    # note: `is_masked` is stored but unused in the reference forward.


def _reference(preds, labels, normalize):
    p = preds.reshape(-1).astype(jnp.float32)
    l = labels.reshape(-1).astype(jnp.float32)
    d = p - l
    mse = jnp.mean(d * d)
    ref = dict(mse=mse, rmse=jnp.sqrt(mse), mae=jnp.mean(jnp.abs(d)))
    if normalize:
        ref["nmse"] = mse / jnp.mean(l * l)
    return ref


def _check(out, ref, names, rtol, atol):
    for name in names:
        assert jnp.allclose(out[name], ref[name], rtol=rtol, atol=atol), (
            name, float(out[name]), float(ref[name]))


if __name__ == "__main__":
    key = jax.random.PRNGKey(0)
    k1, k2, k3, k4, k5, k6, k7, k8 = jax.random.split(key, 8)

    # Case 1: NCHW f32, n % 128 == 0 (zero-copy, select-free hot path)
    preds = jax.random.normal(k1, (2, 4, 16, 16), dtype=jnp.float32)
    labels = jax.random.normal(k2, (2, 4, 16, 16), dtype=jnp.float32)
    out = jax.tree_util.tree_map(jax.block_until_ready,
                                 mse_loss(preds, labels, normalize=True))
    _check(out, _reference(preds, labels, True),
           ("mse", "rmse", "mae", "nmse"), 1e-5, 1e-6)

    # Case 2: normalize=False variant (2-accumulator kernel)
    out2 = jax.tree_util.tree_map(jax.block_until_ready,
                                  mse_loss(preds, labels, normalize=False))
    _check(out2, _reference(preds, labels, False), ("mse", "rmse", "mae"),
           1e-5, 1e-6)
    assert "nmse" not in out2

    # Case 3: ragged bf16 (masked ragged block in kernel + <128-elem epilogue)
    p3 = jax.random.normal(k3, (4, 17, 17), dtype=jnp.bfloat16)
    l3 = jax.random.normal(k4, (4, 17, 17), dtype=jnp.bfloat16)
    out3 = jax.tree_util.tree_map(jax.block_until_ready,
                                  mse_loss(p3, l3, normalize=True))
    _check(out3, _reference(p3, l3, True), ("mse", "rmse", "mae", "nmse"),
           1e-4, 1e-5)

    # Case 4: tiny bf16 input (< 128 elements, pure plain-JAX epilogue)
    p4 = jax.random.normal(k5, (3, 5, 7), dtype=jnp.bfloat16)
    l4 = jax.random.normal(k6, (3, 5, 7), dtype=jnp.bfloat16)
    out4 = jax.tree_util.tree_map(jax.block_until_ready,
                                  mse_loss(p4, l4, normalize=True))
    _check(out4, _reference(p4, l4, True), ("mse", "rmse", "mae", "nmse"),
           1e-4, 1e-5)

    # Case 5: larger f32 (multi-block grid, chunked fori loop, ragged last
    #         block + tail epilogue; exercises 2-core interleave on v7x)
    p5 = jax.random.normal(k7, (1_061_400,), dtype=jnp.float32)
    l5 = jax.random.normal(k8, (1_061_400,), dtype=jnp.float32)
    out5 = jax.tree_util.tree_map(jax.block_until_ready,
                                  mse_loss(p5, l5, normalize=True))
    _check(out5, _reference(p5, l5, True), ("mse", "rmse", "mae", "nmse"),
           1e-4, 1e-6)

    print("KERNEL_OK")
</pallas_src>

<mosaic_0001>
module attributes {stable_mosaic.version = 11 : i64} {
  func.func @_mse_sums_kernel(%arg0: i32, %arg1: i32, %arg2: memref<16x128xf32, #tpu.memory_space<vmem>>, %arg3: memref<16x128xf32, #tpu.memory_space<vmem>>, %arg4: memref<1x3xf32, #tpu.memory_space<smem>>, %arg5: memref<8x128xf32, #tpu.memory_space<vmem>>, %arg6: memref<8x128xf32, #tpu.memory_space<vmem>>, %arg7: memref<8x128xf32, #tpu.memory_space<vmem>>) attributes {dimension_semantics = [#tpu.dimension_semantics<parallel>, #tpu.dimension_semantics<arbitrary>], iteration_bounds = array<i64: 1, 1>, scalar_prefetch = 0 : i64, scratch_operands = 3 : i64, tpu.core_type = #tpu.core_type<tc>, window_params = [{transform_indices = @transform_0, window_bounds = array<i64: 16, 128>}, {transform_indices = @transform_1, window_bounds = array<i64: 16, 128>}, {transform_indices = @transform_2, window_bounds = array<i64: 1, 3>}]} {
    %c0_i32 = arith.constant 0 : i32
    %0 = arith.cmpi eq, %arg1, %c0_i32 : i32
    %1 = arith.extui %0 : i1 to i32
    %c0_i32_0 = arith.constant 0 : i32
    %2 = arith.cmpi ne, %1, %c0_i32_0 : i32
    scf.if %2 {
      %cst_19 = arith.constant 0.000000e+00 : f32
      %31 = vector.broadcast %cst_19 : f32 to vector<8x128xf32>
      %c0_20 = arith.constant 0 : index
      %c0_21 = arith.constant 0 : index
      %32 = vector.load %arg5[%c0_20, %c0_21] : memref<8x128xf32, #tpu.memory_space<vmem>>, vector<8x128xf32>
      tpu.vector_store %arg5[%c0_20, %c0_21], %31 {strides = array<i32>} : memref<8x128xf32, #tpu.memory_space<vmem>>, vector<8x128xf32>,
      %cst_22 = arith.constant 0.000000e+00 : f32
      %33 = vector.broadcast %cst_22 : f32 to vector<8x128xf32>
      %c0_23 = arith.constant 0 : index
      %c0_24 = arith.constant 0 : index
      %34 = vector.load %arg6[%c0_23, %c0_24] : memref<8x128xf32, #tpu.memory_space<vmem>>, vector<8x128xf32>
      tpu.vector_store %arg6[%c0_23, %c0_24], %33 {strides = array<i32>} : memref<8x128xf32, #tpu.memory_space<vmem>>, vector<8x128xf32>,
      %cst_25 = arith.constant 0.000000e+00 : f32
      %35 = vector.broadcast %cst_25 : f32 to vector<8x128xf32>
      %c0_26 = arith.constant 0 : index
      %c0_27 = arith.constant 0 : index
      %36 = vector.load %arg7[%c0_26, %c0_27] : memref<8x128xf32, #tpu.memory_space<vmem>>, vector<8x128xf32>
      tpu.vector_store %arg7[%c0_26, %c0_27], %35 {strides = array<i32>} : memref<8x128xf32, #tpu.memory_space<vmem>>, vector<8x128xf32>,
    } else {
    }
    %c0_i32_1 = arith.constant 0 : i32
    %c16_i32 = arith.constant 16 : i32
    %3 = arith.muli %c0_i32_1, %c16_i32 : i32
    %4 = tpu.assume_multiple %3, 16 : i32
    %5 = arith.index_cast %4 : i32 to index
    %c0 = arith.constant 0 : index
    %6 = vector.load %arg2[%5, %c0] : memref<16x128xf32, #tpu.memory_space<vmem>>, vector<16x128xf32>
    %7 = arith.index_cast %4 : i32 to index
    %c0_2 = arith.constant 0 : index
    %8 = vector.load %arg3[%7, %c0_2] : memref<16x128xf32, #tpu.memory_space<vmem>>, vector<16x128xf32>
    %9 = arith.subf %6, %8 : vector<16x128xf32>
    %c0_3 = arith.constant 0 : index
    %c0_4 = arith.constant 0 : index
    %10 = vector.load %arg5[%c0_3, %c0_4] : memref<8x128xf32, #tpu.memory_space<vmem>>, vector<8x128xf32>
    %11 = arith.mulf %9, %9 : vector<16x128xf32>
    %12 = vector.shape_cast %11 : vector<16x128xf32> to vector<2x8x128xf32>
    %cst = arith.constant dense<0.000000e+00> : vector<8x128xf32>
    %13 = vector.multi_reduction <add>, %12, %cst [0] : vector<2x8x128xf32> to vector<8x128xf32>
    %14 = arith.addf %10, %13 : vector<8x128xf32>
    %c0_5 = arith.constant 0 : index
    %c0_6 = arith.constant 0 : index
    %15 = vector.load %arg5[%c0_5, %c0_6] : memref<8x128xf32, #tpu.memory_space<vmem>>, vector<8x128xf32>
    tpu.vector_store %arg5[%c0_5, %c0_6], %14 {strides = array<i32>} : memref<8x128xf32, #tpu.memory_space<vmem>>, vector<8x128xf32>,
    %c0_7 = arith.constant 0 : index
    %c0_8 = arith.constant 0 : index
    %16 = vector.load %arg6[%c0_7, %c0_8] : memref<8x128xf32, #tpu.memory_space<vmem>>, vector<8x128xf32>
    %17 = math.absf %9 : vector<16x128xf32>
    %18 = vector.shape_cast %17 : vector<16x128xf32> to vector<2x8x128xf32>
    %cst_9 = arith.constant dense<0.000000e+00> : vector<8x128xf32>
    %19 = vector.multi_reduction <add>, %18, %cst_9 [0] : vector<2x8x128xf32> to vector<8x128xf32>
    %20 = arith.addf %16, %19 : vector<8x128xf32>
    %c0_10 = arith.constant 0 : index
    %c0_11 = arith.constant 0 : index
    %21 = vector.load %arg6[%c0_10, %c0_11] : memref<8x128xf32, #tpu.memory_space<vmem>>, vector<8x128xf32>
    tpu.vector_store %arg6[%c0_10, %c0_11], %20 {strides = array<i32>} : memref<8x128xf32, #tpu.memory_space<vmem>>, vector<8x128xf32>,
    %c0_12 = arith.constant 0 : index
    %c0_13 = arith.constant 0 : index
    %22 = vector.load %arg7[%c0_12, %c0_13] : memref<8x128xf32, #tpu.memory_space<vmem>>, vector<8x128xf32>
    %23 = arith.mulf %8, %8 : vector<16x128xf32>
    %24 = vector.shape_cast %23 : vector<16x128xf32> to vector<2x8x128xf32>
    %cst_14 = arith.constant dense<0.000000e+00> : vector<8x128xf32>
    %25 = vector.multi_reduction <add>, %24, %cst_14 [0] : vector<2x8x128xf32> to vector<8x128xf32>
    %26 = arith.addf %22, %25 : vector<8x128xf32>
    %c0_15 = arith.constant 0 : index
    %c0_16 = arith.constant 0 : index
    %27 = vector.load %arg7[%c0_15, %c0_16] : memref<8x128xf32, #tpu.memory_space<vmem>>, vector<8x128xf32>
    tpu.vector_store %arg7[%c0_15, %c0_16], %26 {strides = array<i32>} : memref<8x128xf32, #tpu.memory_space<vmem>>, vector<8x128xf32>,
    %c1_i32 = arith.constant 1 : i32
    %c0_i32_17 = arith.constant 0 : i32
    %28 = arith.cmpi eq, %arg1, %c0_i32_17 : i32
    %29 = arith.extui %28 : i1 to i32
    %c0_i32_18 = arith.constant 0 : i32
    %30 = arith.cmpi ne, %29, %c0_i32_18 : i32
    scf.if %30 {
      %c0_19 = arith.constant 0 : index
      %c0_20 = arith.constant 0 : index
      %31 = vector.load %arg5[%c0_19, %c0_20] : memref<8x128xf32, #tpu.memory_space<vmem>>, vector<8x128xf32>
      %32 = vector.shape_cast %31 : vector<8x128xf32> to vector<1x8x128xf32>
      %cst_21 = arith.constant dense<0.000000e+00> : vector<1xf32>
      %33 = vector.multi_reduction <add>, %32, %cst_21 [1, 2] : vector<1x8x128xf32> to vector<1xf32>
      %34 = vector.shape_cast %33 : vector<1xf32> to vector<1x1x1xf32>
      %35 = vector.extract %34[0, 0, 0] : f32 from vector<1x1x1xf32>
      %c0_22 = arith.constant 0 : index
      %c0_23 = arith.constant 0 : index
      %36 = memref.load %arg4[%c0_22, %c0_23] : memref<1x3xf32, #tpu.memory_space<smem>>
      memref.store %35, %arg4[%c0_22, %c0_23] : memref<1x3xf32, #tpu.memory_space<smem>>
      %c0_24 = arith.constant 0 : index
      %c0_25 = arith.constant 0 : index
      %37 = vector.load %arg6[%c0_24, %c0_25] : memref<8x128xf32, #tpu.memory_space<vmem>>, vector<8x128xf32>
      %38 = vector.shape_cast %37 : vector<8x128xf32> to vector<1x8x128xf32>
      %cst_26 = arith.constant dense<0.000000e+00> : vector<1xf32>
      %39 = vector.multi_reduction <add>, %38, %cst_26 [1, 2] : vector<1x8x128xf32> to vector<1xf32>
      %40 = vector.shape_cast %39 : vector<1xf32> to vector<1x1x1xf32>
      %41 = vector.extract %40[0, 0, 0] : f32 from vector<1x1x1xf32>
      %c0_27 = arith.constant 0 : index
      %c1 = arith.constant 1 : index
      %42 = memref.load %arg4[%c0_27, %c1] : memref<1x3xf32, #tpu.memory_space<smem>>
      memref.store %41, %arg4[%c0_27, %c1] : memref<1x3xf32, #tpu.memory_space<smem>>
      %c0_28 = arith.constant 0 : index
      %c0_29 = arith.constant 0 : index
      %43 = vector.load %arg7[%c0_28, %c0_29] : memref<8x128xf32, #tpu.memory_space<vmem>>, vector<8x128xf32>
      %44 = vector.shape_cast %43 : vector<8x128xf32> to vector<1x8x128xf32>
      %cst_30 = arith.constant dense<0.000000e+00> : vector<1xf32>
      %45 = vector.multi_reduction <add>, %44, %cst_30 [1, 2] : vector<1x8x128xf32> to vector<1xf32>
      %46 = vector.shape_cast %45 : vector<1xf32> to vector<1x1x1xf32>
      %47 = vector.extract %46[0, 0, 0] : f32 from vector<1x1x1xf32>
      %c0_31 = arith.constant 0 : index
      %c2 = arith.constant 2 : index
      %48 = memref.load %arg4[%c0_31, %c2] : memref<1x3xf32, #tpu.memory_space<smem>>
      memref.store %47, %arg4[%c0_31, %c2] : memref<1x3xf32, #tpu.memory_space<smem>>
    } else {
    }
    return
  }
  func.func @transform_0(%arg0: i32, %arg1: i32) -> (i32, i32) {
    %c1_i32 = arith.constant 1 : i32
    %0 = arith.muli %arg1, %c1_i32 : i32
    %1 = arith.addi %0, %arg0 : i32
    %c0_i32 = arith.constant 0 : i32
    %c0_i32_0 = arith.constant 0 : i32
    return %1, %c0_i32 : i32, i32
  }
  func.func @transform_1(%arg0: i32, %arg1: i32) -> (i32, i32) {
    %c1_i32 = arith.constant 1 : i32
    %0 = arith.muli %arg1, %c1_i32 : i32
    %1 = arith.addi %0, %arg0 : i32
    %c0_i32 = arith.constant 0 : i32
    %c0_i32_0 = arith.constant 0 : i32
    return %1, %c0_i32 : i32, i32
  }
  func.func @transform_2(%arg0: i32, %arg1: i32) -> (i32, i32) {
    %c0_i32 = arith.constant 0 : i32
    %c0_i32_0 = arith.constant 0 : i32
    return %arg0, %c0_i32 : i32, i32
  }
}

</mosaic_0001>

<llo_original>
// kernel: mse_loss.1
$region0: #{mse_loss.1}
  #allocation0 [shape = 'u32[]', space=smem, size = 0x4, offset = 0x4, fixed_abs, tag = 'smem constant byte address 0x4 - core index']
  #allocation1 [shape = 'u32[144,128]{1,0:T(1,128)}', space=vmem, size = 0x12000, scoped, tag = 'internal scratch']
  #allocation2 [shape = 'f32[8,128]{1,0:T(8,128)}', space=vmem, size = 0x1000, scoped, tag = 'scratch operand']
  #allocation3 [shape = 'f32[8,128]{1,0:T(8,128)}', space=vmem, size = 0x1000, scoped, tag = 'scratch operand']
  #allocation4 [shape = 'f32[8,128]{1,0:T(8,128)}', space=vmem, size = 0x1000, scoped, tag = 'scratch operand']
  %s0 = inlined_call_operand.vmem [shape: f32[16,128], index: 0, kind: input, shape index: {}]
  %s1 = inlined_call_operand.vmem [shape: f32[16,128], index: 1, kind: input, shape index: {}]
  %s2 = inlined_call_operand.vmem [shape: f32[1,3], index: 2, kind: output, shape index: {}]
  %s3 = sld [smem:[#allocation0]]
  $region26: #{mse_loss.1} parent=0
    _
  %s5 = ssub.s32 1, %s3
  %s6 = scalar_select 0, %s5, %s3
  $region1: #{mse_loss.1} parent=0
    #allocation5 [shape = 'u8[512]{0}', space=smem, size = 0x200, scoped, tag = 'output window, operand 0, single buffered']
    #allocation6 [shape = 's32[1]{0}', space=sflag, size = 0x4, scoped, tag = 'scoped memory for mse_loss.1']
    %7 = vsyncpa [#allocation6], 0
    // Predicated region
    $region2: #{mse_loss.1} parent=1 // pred_check
      _
    $region3: #{mse_loss.1} parent=1 // pred_check_branch
      %9 = sbr.rel (0) target = $region5
    $region4: #{mse_loss.1} parent=1 // pred_region
      %s10 = sadd.s32 0, 0
      %s11 = smul.u32 2, %s10
      %p12 = scmp.lt.s32.totalorder %s11, 1
      %s13 = scalar_select %p12, %s11, 1
      %s14 = smul.addr %s13, 8
      %s15 = scalar_lea.vmem %s0, %s14
      %s16 = sadd.s32 0, 0
      %s17 = smul.u32 2, %s16
    $region5: #{mse_loss.1} parent=1 // pred_fallthru
      _
    // Predicated region
    $region6: #{mse_loss.1} parent=1 // pred_check
      _
    $region7: #{mse_loss.1} parent=1 // pred_check_branch
      %19 = sbr.rel (0) target = $region9
    $region8: #{mse_loss.1} parent=1 // pred_region
      %s20 = sadd.s32 0, 0
      %s21 = smul.u32 2, %s20
      %p22 = scmp.lt.s32.totalorder %s21, 1
      %s23 = scalar_select %p22, %s21, 1
      %s24 = smul.addr %s23, 8
      %s25 = scalar_lea.vmem %s1, %s24
      %s26 = sadd.s32 0, 0
      %s27 = smul.u32 2, %s26
    $region9: #{mse_loss.1} parent=1 // pred_fallthru
      _
    %s28 = sadd.s32 0, 0
    %s29 = smul.u32 2, %s28
    %p30 = scmp.lt.s32.totalorder %s29, 1
    %s31 = scalar_select %p30, %s29, 1
    %s32 = smul.addr %s31, 8
    %s33 = scalar_lea.vmem %s0, %s32
    %s34 = sadd.s32 0, 0
    %s35 = smul.u32 2, %s34
    %p36 = scmp.lt.s32.totalorder %s35, 1
    %s37 = scalar_select %p36, %s35, 1
    %s38 = smul.addr %s37, 8
    %s39 = scalar_lea.vmem %s1, %s38
    %s40 = sadd.s32 0, 0
    %s41 = smul.u32 2, %s40
    %p42 = scmp.lt.s32.totalorder %s41, 1
    %s43 = scalar_select %p42, %s41, 1
    %s44 = smul.addr %s43, 8
    %s45 = scalar_lea.vmem %s0, %s44
    %s46 = sadd.s32 0, 0
    %s47 = smul.u32 2, %s46
    %s48 = sadd.s32 0, 0
    %s49 = smul.u32 2, %s48
    %p50 = scmp.lt.s32.totalorder %s49, 1
    %s51 = scalar_select %p50, %s49, 1
    %s52 = smul.addr %s51, 8
    %s53 = scalar_lea.vmem %s1, %s52
    %s54 = sadd.s32 0, 0
    %s55 = smul.u32 2, %s54
    %p56 = scmp.eq.s32.totalorder 0, 0
    // Predicated region
    $region10: #{mse_loss.1} parent=1 // pred_check
      %p57 = pneg %p56
    $region11: #{mse_loss.1} parent=1 // pred_check_branch
      %59 = sbr.rel (%p57) target = $region13
    $region12: #{mse_loss.1} parent=1 // pred_region
      %60 = vst [vmem:[#allocation2] sm:$0xff] 0.0
      %61 = vst [vmem:[#allocation3] sm:$0xff] 0.0
      %62 = vst [vmem:[#allocation4] sm:$0xff] 0.0
    $region13: #{mse_loss.1} parent=1 // pred_fallthru
      _
    %v63 = vld [vmem:[%s45] sm:$0xff]
    %v64 = vld [vmem:[%s45 + $0x8] sm:$0xff]
    %v65 = vld [vmem:[%s53] sm:$0xff]
    %v66 = vld [vmem:[%s53 + $0x8] sm:$0xff]
    %v67 = vsub.f32 %v63, %v65
    %v68 = vsub.f32 %v64, %v66
    %v69 = vld [vmem:[#allocation2] sm:$0xff]
    %v70 = vmul.f32 %v67, %v67
    %v71 = vmul.f32 %v68, %v68
    %v72 = vadd.f32 %v70, %v71
    %v73 = vadd.f32 %v69, %v72
    %74 = vst [vmem:[#allocation2] sm:$0xff] %v73
    %v75 = vld [vmem:[#allocation3] sm:$0xff]
    %v76 = vand.u32 2147483647, %v67
    %v77 = vand.u32 2147483647, %v68
    %v78 = vadd.f32 %v76, %v77
    %v79 = vadd.f32 %v75, %v78
    %80 = vst [vmem:[#allocation3] sm:$0xff] %v79
    %v81 = vld [vmem:[#allocation4] sm:$0xff]
    %v82 = vmul.f32 %v65, %v65
    %v83 = vmul.f32 %v66, %v66
    %v84 = vadd.f32 %v82, %v83
    %v85 = vadd.f32 %v81, %v84
    %86 = vst [vmem:[#allocation4] sm:$0xff] %v85
    // Predicated region
    $region14: #{mse_loss.1} parent=1 // pred_check
      %p87 = pneg %p56
    $region15: #{mse_loss.1} parent=1 // pred_check_branch
      %89 = sbr.rel (%p87) target = $region17
    $region16: #{mse_loss.1} parent=1 // pred_region
      %v90 = vld [vmem:[#allocation2] sm:$0xff]
      %91 = vadd.xlane.f32.xlu0 %v90
      %v92 = vpop.xlane.xlu0 %91
      %v93 = vrot.slane %v92, 4
      %v94 = vadd.f32 %v92, %v93
      %v95 = vrot.slane %v94, 2
      %v96 = vadd.f32 %v94, %v95
      %v97 = vrot.slane %v96, 1
      %v98 = vadd.f32 %v96, %v97
      %s99 = vtos %v98
      %s100 = scalar_lea.smem [#allocation5], 0
      %101 = sst [smem:[%s100]] %s99
      %v102 = vld [vmem:[#allocation3] sm:$0xff]
      %103 = vadd.xlane.f32.xlu0 %v102
      %v104 = vpop.xlane.xlu0 %103
      %v105 = vrot.slane %v104, 4
      %v106 = vadd.f32 %v104, %v105
      %v107 = vrot.slane %v106, 2
      %v108 = vadd.f32 %v106, %v107
      %v109 = vrot.slane %v108, 1
      %v110 = vadd.f32 %v108, %v109
      %s111 = vtos %v110
      %s112 = scalar_lea.smem [#allocation5], 1
      %113 = sst [smem:[%s112]] %s111
      %v114 = vld [vmem:[#allocation4] sm:$0xff]
      %115 = vadd.xlane.f32.xlu0 %v114
      %v116 = vpop.xlane.xlu0 %115
      %v117 = vrot.slane %v116, 4
      %v118 = vadd.f32 %v116, %v117
      %v119 = vrot.slane %v118, 2
      %v120 = vadd.f32 %v118, %v119
      %v121 = vrot.slane %v120, 1
      %v122 = vadd.f32 %v120, %v121
      %s123 = vtos %v122
      %s124 = scalar_lea.smem [#allocation5], 2
      %125 = sst [smem:[%s124]] %s123
    $region17: #{mse_loss.1} parent=1 // pred_fallthru
      _
    // Predicated region
    $region18: #{mse_loss.1} parent=1 // pred_check
      _
    $region19: #{mse_loss.1} parent=1 // pred_check_branch
      %127 = sbr.rel (0) target = $region21
    $region20: #{mse_loss.1} parent=1 // pred_region
      %s129 = ssub.s32 16, 16
      %130 = vsyncadd [#allocation6], %s129
      %s132 = sshll.u32 %s2, 4
      %s133 = int_to_ptr.vmem [resolvable:$true] %s132
      %135 = dma.smem_to_vmem [#allocation5], 16, %s133, [#allocation6]
    $region21: #{mse_loss.1} parent=1 // pred_fallthru
      _
    // Predicated region
    $region22: #{mse_loss.1} parent=1 // pred_check
      _
    $region23: #{mse_loss.1} parent=1 // pred_check_branch
      %137 = sbr.rel (0) target = $region25
    $region24: #{mse_loss.1} parent=1 // pred_region
      %138 = dma.done [#allocation6], 16
    $region25: #{mse_loss.1} parent=1 // pred_fallthru
      _
    %139 = sfence
    %140 = vsyncpa [#allocation6], 1

</llo_original>
